<compile_context>
chip_gen: v7x
topology: tpu7x:2x2x1
jax: 0.10.0
libtpu: 0.0.40
codegen_flags: <defaults>
</compile_context>

<pallas_src>
import jax
import jax.numpy as jnp
from jax.experimental import pallas as pl
from jax.experimental.pallas import tpu as pltpu

BN_EPS = 1e-5
LANE = 128      # feature / hidden dims padded to 128 -> lane-dense MXU tiles


def _round_up(v, m):
    return -(-v // m) * m


def _pad2d(a, rows, cols):
    return jnp.pad(a, ((0, rows - a.shape[0]), (0, cols - a.shape[1])))


def _cparams(semantics, est_bytes):
    # Explicit scoped-VMEM budget (defaults are only 16/32 MiB); keep headroom
    # below v7x's 64 MiB physical VMEM.
    return pltpu.CompilerParams(
        dimension_semantics=semantics,
        vmem_limit_bytes=int(min(max(2 * est_bytes, 8 << 20), 64 << 20)))


# ---------------------------------------------------------------------------
# Kernel 1: one GIN layer over a row-block grid of A  (BN "stats" pass).
#   agg = ((A+I) @ h_prev - deg * mean_prev) * istd_prev     (prev BN folded in)
#   hf  = relu(relu(agg @ W1 + b1) @ W2 + b2)                (pre-BN features)
#   outputs: hf row tile (bf16) + masked partial BN statistics
# ---------------------------------------------------------------------------
def make_gin_layer_kernel(tm, n_real):
    def kernel(a_ref, h_ref, deg_ref, mean_ref, istd_ref,
               w1_ref, b1_ref, w2_ref, b2_ref,
               hf_ref, sum_ref, ssq_ref):
        i = pl.program_id(0)
        a = a_ref[...].astype(jnp.bfloat16)     # int8 -> bf16 widen (VPU filler)
        agg = jnp.dot(a, h_ref[...], preferred_element_type=jnp.float32)
        agg = (agg - deg_ref[...] * mean_ref[...]) * istd_ref[...]
        z = jnp.dot(agg.astype(jnp.bfloat16), w1_ref[...],
                    preferred_element_type=jnp.float32) + b1_ref[...]
        z = jnp.maximum(z, 0.0)
        z = jnp.dot(z.astype(jnp.bfloat16), w2_ref[...],
                    preferred_element_type=jnp.float32) + b2_ref[...]
        hf = jnp.maximum(z, 0.0)
        hf_ref[...] = hf.astype(jnp.bfloat16)
        # masked partial BatchNorm stats (exclude zero-padded node rows)
        row = jax.lax.broadcasted_iota(jnp.int32, (tm, 1), 0) + i * tm
        hm = jnp.where(row < n_real, hf, 0.0)
        sum_ref[...] = jnp.sum(hm, axis=0, keepdims=True).reshape(1, 1, LANE)
        ssq_ref[...] = jnp.sum(hm * hm, axis=0, keepdims=True).reshape(1, 1, LANE)
    return kernel


def gin_layer(a_i8, h_prev, deg, mean_prev, istd_prev, w1, b1, w2, b2, tm, n_real):
    n_pad = a_i8.shape[0]
    nb = n_pad // tm
    hp = LANE
    est = (2 * tm * n_pad            # A tiles, int8, double-buffered
           + 2 * n_pad * hp * 2      # resident h (bf16)
           + 2 * tm * hp * 2         # hf output tiles (bf16)
           + 8 * hp * hp * 2         # weights
           + 8 * tm * hp * 4)        # f32 temporaries (agg / z)
    return pl.pallas_call(
        make_gin_layer_kernel(tm, n_real),
        grid=(nb,),
        in_specs=[
            pl.BlockSpec((tm, n_pad), lambda i: (i, 0)),   # A(+I) int8, streamed
            pl.BlockSpec((n_pad, hp), lambda i: (0, 0)),   # h_prev, VMEM-resident
            pl.BlockSpec((tm, 1),     lambda i: (i, 0)),   # deg = rowsum(A+I)
            pl.BlockSpec((1, hp),     lambda i: (0, 0)),   # prev-layer BN mean
            pl.BlockSpec((1, hp),     lambda i: (0, 0)),   # prev-layer BN inv-std
            pl.BlockSpec((hp, hp),    lambda i: (0, 0)),   # W1
            pl.BlockSpec((1, hp),     lambda i: (0, 0)),   # b1
            pl.BlockSpec((hp, hp),    lambda i: (0, 0)),   # W2
            pl.BlockSpec((1, hp),     lambda i: (0, 0)),   # b2
        ],
        out_specs=[
            pl.BlockSpec((tm, hp),    lambda i: (i, 0)),
            pl.BlockSpec((1, 1, hp),  lambda i: (i, 0, 0)),
            pl.BlockSpec((1, 1, hp),  lambda i: (i, 0, 0)),
        ],
        out_shape=(
            jax.ShapeDtypeStruct((n_pad, hp), jnp.bfloat16),
            jax.ShapeDtypeStruct((nb, 1, hp), jnp.float32),
            jax.ShapeDtypeStruct((nb, 1, hp), jnp.float32),
        ),
        compiler_params=_cparams(("parallel",), est),
    )(a_i8, h_prev, deg, mean_prev, istd_prev, w1, b1, w2, b2)


# ---------------------------------------------------------------------------
# Kernel 2: global_add_pool (all layers, BN folded in) + projection head,
# tiled over node-row blocks with a [G, 3*128] f32 accumulator.
# ---------------------------------------------------------------------------
def make_pool_proj_kernel(num_layers):
    def kernel(*refs):
        p_ref = refs[0]
        hf_refs = refs[1:1 + num_layers]
        (counts_ref, mean_ref, istd_ref,
         pw1_ref, pb1_ref, pw2_ref, pb2_ref) = refs[1 + num_layers:8 + num_layers]
        y_ref = refs[8 + num_layers]
        acc_ref = refs[9 + num_layers]

        k = pl.program_id(0)

        @pl.when(k == 0)
        def _():
            acc_ref[...] = jnp.zeros_like(acc_ref)

        p = p_ref[...]                              # [G, TM] bf16 (0/1, exact)
        for l, hf_ref in enumerate(hf_refs):        # unrolled (static)
            acc_ref[:, l * LANE:(l + 1) * LANE] += jnp.dot(
                p, hf_ref[...], preferred_element_type=jnp.float32)

        @pl.when(k == pl.num_programs(0) - 1)
        def _():
            # P @ BN(hf) == (P @ hf - counts * mean) * inv_std
            ycat = (acc_ref[...] - counts_ref[...] * mean_ref[...]) * istd_ref[...]
            z = jnp.dot(ycat.astype(jnp.bfloat16), pw1_ref[...],
                        preferred_element_type=jnp.float32) + pb1_ref[...]
            z = jnp.maximum(z, 0.0)
            y_ref[...] = jnp.dot(z.astype(jnp.bfloat16), pw2_ref[...],
                                 preferred_element_type=jnp.float32) + pb2_ref[...]
    return kernel


def pool_proj(pool_bf, hfs, counts, mean_cat, istd_cat, proj_w, tm):
    num_layers = len(hfs)
    g_pad, n_pad = pool_bf.shape
    ep = num_layers * LANE
    nb = n_pad // tm
    pw1, pb1, pw2, pb2 = proj_w
    est = (2 * g_pad * tm * 2 + num_layers * 2 * tm * LANE * 2
           + 2 * 2 * ep * ep * 2 + 4 * g_pad * ep * 4)
    in_specs = ([pl.BlockSpec((g_pad, tm), lambda k: (0, k))]
                + [pl.BlockSpec((tm, LANE), lambda k: (k, 0))] * num_layers
                + [pl.BlockSpec((g_pad, 1), lambda k: (0, 0)),
                   pl.BlockSpec((1, ep),    lambda k: (0, 0)),
                   pl.BlockSpec((1, ep),    lambda k: (0, 0)),
                   pl.BlockSpec((ep, ep),   lambda k: (0, 0)),
                   pl.BlockSpec((1, ep),    lambda k: (0, 0)),
                   pl.BlockSpec((ep, ep),   lambda k: (0, 0)),
                   pl.BlockSpec((1, ep),    lambda k: (0, 0))])
    return pl.pallas_call(
        make_pool_proj_kernel(num_layers),
        grid=(nb,),
        in_specs=in_specs,
        out_specs=pl.BlockSpec((g_pad, ep), lambda k: (0, 0)),
        out_shape=jax.ShapeDtypeStruct((g_pad, ep), jnp.float32),
        scratch_shapes=[pltpu.VMEM((g_pad, ep), jnp.float32)],
        compiler_params=_cparams(("arbitrary",), est),
    )(pool_bf, *hfs, counts, mean_cat, istd_cat, pw1, pb1, pw2, pb2)


# ---------------------------------------------------------------------------
# Wrapper: pad lane-dense, run L GIN-layer passes + pooling/projection pass
# ---------------------------------------------------------------------------
def simclr_forward(x, a_hat, batch, gin_params, proj_params, hidden_dim, num_graphs):
    """y, M = encoder(x, edge_index, batch); y = proj_head(y); return y."""
    num_layers = len(gin_params)
    n, feat = x.shape
    assert hidden_dim <= LANE and feat <= LANE
    hp = LANE
    ep = num_layers * hp
    e = hidden_dim * num_layers

    # --- tile sizes / padded shapes (node-row padding is masked out of the BN
    #     statistics and zeroed out of A / P columns, so results are exact) ---
    n_pad = _round_up(n, 128)
    tm = 1024
    while tm > 128 and 2 * tm * n_pad > (16 << 20):   # keep A tiles v7x-friendly
        tm //= 2
    tm = min(tm, n_pad)
    n_pad = _round_up(n, tm)
    g_pad = _round_up(max(num_graphs, 16), 16)

    # --- host-side (XLA) packing glue ---
    a_p = _pad2d(a_hat, n_pad, n_pad)
    a_i8 = a_p.astype(jnp.int8)                       # values 0/1/2 -> exact
    deg = jnp.sum(a_p, axis=1, keepdims=True)         # rowsum(A+I), f32 [n_pad,1]
    x_p = _pad2d(x, n_pad, hp).astype(jnp.bfloat16)

    batch_p = jnp.concatenate([batch, jnp.full((n_pad - n,), -1, batch.dtype)])
    pool_f = (batch_p[None, :] == jnp.arange(g_pad)[:, None]).astype(jnp.float32)
    counts = jnp.sum(pool_f, axis=1, keepdims=True)   # nodes per graph, [g_pad,1]
    pool_bf = pool_f.astype(jnp.bfloat16)             # 0/1 -> exact

    gin_w = [( _pad2d(w1, hp, hp).astype(jnp.bfloat16), _pad2d(b1, 1, hp),
               _pad2d(w2, hp, hp).astype(jnp.bfloat16), _pad2d(b2, 1, hp))
             for (w1, b1, w2, b2) in gin_params]

    pw1, pb1, pw2, pb2 = proj_params

    def pad_proj_w(w):            # scatter [e, e] block-wise into [ep, ep]
        wr = w.reshape(num_layers, hidden_dim, num_layers, hidden_dim)
        wp = jnp.zeros((num_layers, hp, num_layers, hp), w.dtype)
        wp = wp.at[:, :hidden_dim, :, :hidden_dim].set(wr)
        return wp.reshape(ep, ep)

    def pad_proj_b(b):
        bp = jnp.zeros((num_layers, hp), b.dtype)
        bp = bp.at[:, :hidden_dim].set(b.reshape(num_layers, hidden_dim))
        return bp.reshape(1, ep)

    proj_w = (pad_proj_w(pw1).astype(jnp.bfloat16), pad_proj_b(pb1),
              pad_proj_w(pw2).astype(jnp.bfloat16), pad_proj_b(pb2))

    # --- encoder: L x (GINConv -> MLP -> ReLU -> BN) over a row-block grid ---
    h = x_p
    mean_prev = jnp.zeros((1, hp), jnp.float32)       # layer 0: input is not BN'd
    istd_prev = jnp.ones((1, hp), jnp.float32)
    hfs, means, istds = [], [], []
    for (w1, b1, w2, b2) in gin_w:
        hf, psum, psq = gin_layer(a_i8, h, deg, mean_prev, istd_prev,
                                  w1, b1, w2, b2, tm, n)
        # tiny cross-block combine of the BN statistics (plain JAX glue)
        s = jnp.sum(psum, axis=(0, 1))
        s2 = jnp.sum(psq, axis=(0, 1))
        mean = s / float(n)
        var = jnp.maximum(s2 / float(n) - mean * mean, 0.0)
        istd = jax.lax.rsqrt(var + BN_EPS)
        mean_prev, istd_prev = mean.reshape(1, hp), istd.reshape(1, hp)
        hfs.append(hf)
        means.append(mean_prev)
        istds.append(istd_prev)
        h = hf                       # BN of this layer is folded into consumers

    mean_cat = jnp.concatenate(means, axis=1)          # [1, ep]
    istd_cat = jnp.concatenate(istds, axis=1)          # [1, ep]

    # --- global_add_pool (all layers) + projection head, tiled over nodes ---
    y_pad = pool_proj(pool_bf, hfs, counts, mean_cat, istd_cat, proj_w, tm)

    # strip padding: rows beyond num_graphs and the zero-padded hidden columns
    y = y_pad[:num_graphs].reshape(num_graphs, num_layers, hp)[:, :, :hidden_dim]
    return y.reshape(num_graphs, e)


# ---------------------------------------------------------------------------
# Deterministic parameter init (matches init_emb: xavier_uniform W, zero bias)
# ---------------------------------------------------------------------------
def xavier_uniform(key, fan_in, fan_out):
    bound = (6.0 / (fan_in + fan_out)) ** 0.5
    return jax.random.uniform(key, (fan_in, fan_out), jnp.float32, -bound, bound)


if __name__ == "__main__":
    num_nodes = 16
    num_features = 8
    hidden_dim = 32
    num_gc_layers = 3
    num_graphs = 2
    embedding_dim = hidden_dim * num_gc_layers

    key = jax.random.PRNGKey(0)
    keys = jax.random.split(key, 1 + 2 * num_gc_layers + 2)

    # --- node features ---
    x = jax.random.normal(keys[0], (num_nodes, num_features), jnp.float32)

    # --- deterministic graph structure: two ring graphs of 8 nodes each ---
    nodes_per_graph = num_nodes // num_graphs
    edges = []
    for g in range(num_graphs):
        base = g * nodes_per_graph
        for i in range(nodes_per_graph):
            a = base + i
            b = base + (i + 1) % nodes_per_graph
            edges.append((a, b))
            edges.append((b, a))
    edge_index = jnp.array(edges, dtype=jnp.int32).T          # [2, num_edges]
    batch = jnp.repeat(jnp.arange(num_graphs, dtype=jnp.int32), nodes_per_graph)

    # dense adjacency with self loops (glue, plain JAX)
    src, dst = edge_index[0], edge_index[1]
    a_hat = jnp.zeros((num_nodes, num_nodes), jnp.float32).at[dst, src].add(1.0)
    a_hat = a_hat + jnp.eye(num_nodes, dtype=jnp.float32)

    # --- GIN encoder parameters ---
    gin_params = []
    for i in range(num_gc_layers):
        in_dim = num_features if i == 0 else hidden_dim
        w1 = xavier_uniform(keys[1 + 2 * i], in_dim, hidden_dim)
        b1 = jnp.zeros((1, hidden_dim), jnp.float32)
        w2 = xavier_uniform(keys[2 + 2 * i], hidden_dim, hidden_dim)
        b2 = jnp.zeros((1, hidden_dim), jnp.float32)
        gin_params.append((w1, b1, w2, b2))

    # --- projection head parameters ---
    pw1 = xavier_uniform(keys[1 + 2 * num_gc_layers], embedding_dim, embedding_dim)
    pb1 = jnp.zeros((1, embedding_dim), jnp.float32)
    pw2 = xavier_uniform(keys[2 + 2 * num_gc_layers], embedding_dim, embedding_dim)
    pb2 = jnp.zeros((1, embedding_dim), jnp.float32)
    proj_params = (pw1, pb1, pw2, pb2)

    y = simclr_forward(x, a_hat, batch, gin_params, proj_params,
                       hidden_dim, num_graphs)
    y = jax.block_until_ready(y)
    assert y.shape == (num_graphs, embedding_dim)
    assert jnp.all(jnp.isfinite(y))
    print("KERNEL_OK")
</pallas_src>

<mosaic_0001>
module attributes {stable_mosaic.version = 11 : i64} {
  func.func @kernel(%arg0: i32, %arg1: memref<128x128xi8, #tpu.memory_space<vmem>>, %arg2: memref<128x128xbf16, #tpu.memory_space<vmem>>, %arg3: memref<128x1xf32, #tpu.memory_space<vmem>>, %arg4: memref<1x128xf32, #tpu.memory_space<vmem>>, %arg5: memref<1x128xf32, #tpu.memory_space<vmem>>, %arg6: memref<128x128xbf16, #tpu.memory_space<vmem>>, %arg7: memref<1x128xf32, #tpu.memory_space<vmem>>, %arg8: memref<128x128xbf16, #tpu.memory_space<vmem>>, %arg9: memref<1x128xf32, #tpu.memory_space<vmem>>, %arg10: memref<128x128xbf16, #tpu.memory_space<vmem>>, %arg11: memref<1x1x128xf32, #tpu.memory_space<vmem>>, %arg12: memref<1x1x128xf32, #tpu.memory_space<vmem>>) attributes {dimension_semantics = [#tpu.dimension_semantics<parallel>], iteration_bounds = array<i64: 1>, scalar_prefetch = 0 : i64, scratch_operands = 0 : i64, tpu.core_type = #tpu.core_type<tc>, window_params = [{transform_indices = @transform_0, window_bounds = array<i64: 128, 128>}, {pipeline_mode = #tpu.pipeline_mode<synchronous>, transform_indices = @transform_1, window_bounds = array<i64: 128, 128>}, {transform_indices = @transform_2, window_bounds = array<i64: 128, 1>}, {pipeline_mode = #tpu.pipeline_mode<synchronous>, transform_indices = @transform_3, window_bounds = array<i64: 1, 128>}, {pipeline_mode = #tpu.pipeline_mode<synchronous>, transform_indices = @transform_4, window_bounds = array<i64: 1, 128>}, {pipeline_mode = #tpu.pipeline_mode<synchronous>, transform_indices = @transform_5, window_bounds = array<i64: 128, 128>}, {pipeline_mode = #tpu.pipeline_mode<synchronous>, transform_indices = @transform_6, window_bounds = array<i64: 1, 128>}, {pipeline_mode = #tpu.pipeline_mode<synchronous>, transform_indices = @transform_7, window_bounds = array<i64: 128, 128>}, {pipeline_mode = #tpu.pipeline_mode<synchronous>, transform_indices = @transform_8, window_bounds = array<i64: 1, 128>}, {transform_indices = @transform_9, window_bounds = array<i64: 128, 128>}, {transform_indices = @transform_10, window_bounds = array<i64: 1, 1, 128>}, {transform_indices = @transform_11, window_bounds = array<i64: 1, 1, 128>}]} {
    %c0 = arith.constant 0 : index
    %c0_0 = arith.constant 0 : index
    %0 = vector.load %arg1[%c0, %c0_0] : memref<128x128xi8, #tpu.memory_space<vmem>>, vector<128x128xi8>
    %1 = arith.sitofp %0 : vector<128x128xi8> to vector<128x128xbf16>
    %c0_1 = arith.constant 0 : index
    %c0_2 = arith.constant 0 : index
    %2 = vector.load %arg2[%c0_1, %c0_2] : memref<128x128xbf16, #tpu.memory_space<vmem>>, vector<128x128xbf16>
    %cst = arith.constant dense<0.000000e+00> : vector<128x128xf32>
    %3 = tpu.matmul %1, %2, %cst {dimension_numbers = #tpu.dot_dimension_numbers<[1], [0], [0], [1], [0, 0, 1, 1], [], []>} : vector<128x128xbf16>, vector<128x128xbf16>, vector<128x128xf32> -> vector<128x128xf32>
    %c0_3 = arith.constant 0 : index
    %c0_4 = arith.constant 0 : index
    %4 = vector.load %arg3[%c0_3, %c0_4] : memref<128x1xf32, #tpu.memory_space<vmem>>, vector<128x1xf32>
    %c0_5 = arith.constant 0 : index
    %c0_6 = arith.constant 0 : index
    %5 = vector.load %arg4[%c0_5, %c0_6] : memref<1x128xf32, #tpu.memory_space<vmem>>, vector<1x128xf32>
    %6 = vector.broadcast %4 : vector<128x1xf32> to vector<128x128xf32>
    %7 = vector.broadcast %5 : vector<1x128xf32> to vector<128x128xf32>
    %8 = arith.mulf %6, %7 : vector<128x128xf32>
    %9 = arith.subf %3, %8 : vector<128x128xf32>
    %c0_7 = arith.constant 0 : index
    %c0_8 = arith.constant 0 : index
    %10 = vector.load %arg5[%c0_7, %c0_8] : memref<1x128xf32, #tpu.memory_space<vmem>>, vector<1x128xf32>
    %11 = vector.broadcast %10 : vector<1x128xf32> to vector<128x128xf32>
    %12 = arith.mulf %9, %11 : vector<128x128xf32>
    %13 = arith.truncf %12 : vector<128x128xf32> to vector<128x128xbf16>
    %c0_9 = arith.constant 0 : index
    %c0_10 = arith.constant 0 : index
    %14 = vector.load %arg6[%c0_9, %c0_10] : memref<128x128xbf16, #tpu.memory_space<vmem>>, vector<128x128xbf16>
    %cst_11 = arith.constant dense<0.000000e+00> : vector<128x128xf32>
    %15 = tpu.matmul %13, %14, %cst_11 {dimension_numbers = #tpu.dot_dimension_numbers<[1], [0], [0], [1], [0, 0, 1, 1], [], []>} : vector<128x128xbf16>, vector<128x128xbf16>, vector<128x128xf32> -> vector<128x128xf32>
    %c0_12 = arith.constant 0 : index
    %c0_13 = arith.constant 0 : index
    %16 = vector.load %arg7[%c0_12, %c0_13] : memref<1x128xf32, #tpu.memory_space<vmem>>, vector<1x128xf32>
    %17 = vector.broadcast %16 : vector<1x128xf32> to vector<128x128xf32>
    %18 = arith.addf %15, %17 : vector<128x128xf32>
    %cst_14 = arith.constant 0.000000e+00 : f32
    %19 = vector.broadcast %cst_14 : f32 to vector<128x128xf32>
    %20 = arith.maximumf %18, %19 : vector<128x128xf32>
    %21 = arith.truncf %20 : vector<128x128xf32> to vector<128x128xbf16>
    %c0_15 = arith.constant 0 : index
    %c0_16 = arith.constant 0 : index
    %22 = vector.load %arg8[%c0_15, %c0_16] : memref<128x128xbf16, #tpu.memory_space<vmem>>, vector<128x128xbf16>
    %cst_17 = arith.constant dense<0.000000e+00> : vector<128x128xf32>
    %23 = tpu.matmul %21, %22, %cst_17 {dimension_numbers = #tpu.dot_dimension_numbers<[1], [0], [0], [1], [0, 0, 1, 1], [], []>} : vector<128x128xbf16>, vector<128x128xbf16>, vector<128x128xf32> -> vector<128x128xf32>
    %c0_18 = arith.constant 0 : index
    %c0_19 = arith.constant 0 : index
    %24 = vector.load %arg9[%c0_18, %c0_19] : memref<1x128xf32, #tpu.memory_space<vmem>>, vector<1x128xf32>
    %25 = vector.broadcast %24 : vector<1x128xf32> to vector<128x128xf32>
    %26 = arith.addf %23, %25 : vector<128x128xf32>
    %cst_20 = arith.constant 0.000000e+00 : f32
    %27 = vector.broadcast %cst_20 : f32 to vector<128x128xf32>
    %28 = arith.maximumf %26, %27 : vector<128x128xf32>
    %29 = arith.truncf %28 : vector<128x128xf32> to vector<128x128xbf16>
    %c0_21 = arith.constant 0 : index
    %c0_22 = arith.constant 0 : index
    %30 = vector.load %arg10[%c0_21, %c0_22] : memref<128x128xbf16, #tpu.memory_space<vmem>>, vector<128x128xbf16>
    tpu.vector_store %arg10[%c0_21, %c0_22], %29 {strides = array<i32>} : memref<128x128xbf16, #tpu.memory_space<vmem>>, vector<128x128xbf16>,
    %31 = tpu.iota {dimensions = array<i32: 0>} : vector<128x1xi32>
    %c128_i32 = arith.constant 128 : i32
    %32 = arith.muli %arg0, %c128_i32 : i32
    %33 = vector.broadcast %32 : i32 to vector<128x1xi32>
    %34 = arith.addi %31, %33 : vector<128x1xi32>
    %c16_i32 = arith.constant 16 : i32
    %35 = vector.broadcast %c16_i32 : i32 to vector<128x1xi32>
    %36 = arith.cmpi slt, %34, %35 : vector<128x1xi32>
    %cst_23 = arith.constant 0.000000e+00 : f32
    %37 = vector.shape_cast %36 : vector<128x1xi1> to vector<128x1xi1>
    %38 = vector.broadcast %37 : vector<128x1xi1> to vector<128x128xi1>
    %39 = vector.broadcast %cst_23 : f32 to vector<128x128xf32>
    %40 = arith.select %38, %28, %39 : vector<128x128xi1>, vector<128x128xf32>
    %cst_24 = arith.constant dense<0.000000e+00> : vector<128xf32>
    %41 = vector.multi_reduction <add>, %40, %cst_24 [0] : vector<128x128xf32> to vector<128xf32>
    %42 = vector.shape_cast %41 : vector<128xf32> to vector<1x128xf32>
    %43 = vector.shape_cast %42 : vector<1x128xf32> to vector<1x1x128xf32>
    %c0_25 = arith.constant 0 : index
    %c0_26 = arith.constant 0 : index
    %c0_27 = arith.constant 0 : index
    %44 = vector.load %arg11[%c0_25, %c0_26, %c0_27] : memref<1x1x128xf32, #tpu.memory_space<vmem>>, vector<1x1x128xf32>
    tpu.vector_store %arg11[%c0_25, %c0_26, %c0_27], %43 {strides = array<i32>} : memref<1x1x128xf32, #tpu.memory_space<vmem>>, vector<1x1x128xf32>,
    %45 = arith.mulf %40, %40 : vector<128x128xf32>
    %cst_28 = arith.constant dense<0.000000e+00> : vector<128xf32>
    %46 = vector.multi_reduction <add>, %45, %cst_28 [0] : vector<128x128xf32> to vector<128xf32>
    %47 = vector.shape_cast %46 : vector<128xf32> to vector<1x128xf32>
    %48 = vector.shape_cast %47 : vector<1x128xf32> to vector<1x1x128xf32>
    %c0_29 = arith.constant 0 : index
    %c0_30 = arith.constant 0 : index
    %c0_31 = arith.constant 0 : index
    %49 = vector.load %arg12[%c0_29, %c0_30, %c0_31] : memref<1x1x128xf32, #tpu.memory_space<vmem>>, vector<1x1x128xf32>
    tpu.vector_store %arg12[%c0_29, %c0_30, %c0_31], %48 {strides = array<i32>} : memref<1x1x128xf32, #tpu.memory_space<vmem>>, vector<1x1x128xf32>,
    return
  }
  func.func @transform_0(%arg0: i32) -> (i32, i32) {
    %c0_i32 = arith.constant 0 : i32
    %c0_i32_0 = arith.constant 0 : i32
    return %arg0, %c0_i32 : i32, i32
  }
  func.func @transform_1(%arg0: i32) -> (i32, i32) {
    %c0_i32 = arith.constant 0 : i32
    %c0_i32_0 = arith.constant 0 : i32
    %c0_i32_1 = arith.constant 0 : i32
    return %c0_i32, %c0_i32_0 : i32, i32
  }
  func.func @transform_2(%arg0: i32) -> (i32, i32) {
    %c0_i32 = arith.constant 0 : i32
    %c0_i32_0 = arith.constant 0 : i32
    return %arg0, %c0_i32 : i32, i32
  }
  func.func @transform_3(%arg0: i32) -> (i32, i32) {
    %c0_i32 = arith.constant 0 : i32
    %c0_i32_0 = arith.constant 0 : i32
    %c0_i32_1 = arith.constant 0 : i32
    return %c0_i32, %c0_i32_0 : i32, i32
  }
  func.func @transform_4(%arg0: i32) -> (i32, i32) {
    %c0_i32 = arith.constant 0 : i32
    %c0_i32_0 = arith.constant 0 : i32
    %c0_i32_1 = arith.constant 0 : i32
    return %c0_i32, %c0_i32_0 : i32, i32
  }
  func.func @transform_5(%arg0: i32) -> (i32, i32) {
    %c0_i32 = arith.constant 0 : i32
    %c0_i32_0 = arith.constant 0 : i32
    %c0_i32_1 = arith.constant 0 : i32
    return %c0_i32, %c0_i32_0 : i32, i32
  }
  func.func @transform_6(%arg0: i32) -> (i32, i32) {
    %c0_i32 = arith.constant 0 : i32
    %c0_i32_0 = arith.constant 0 : i32
    %c0_i32_1 = arith.constant 0 : i32
    return %c0_i32, %c0_i32_0 : i32, i32
  }
  func.func @transform_7(%arg0: i32) -> (i32, i32) {
    %c0_i32 = arith.constant 0 : i32
    %c0_i32_0 = arith.constant 0 : i32
    %c0_i32_1 = arith.constant 0 : i32
    return %c0_i32, %c0_i32_0 : i32, i32
  }
  func.func @transform_8(%arg0: i32) -> (i32, i32) {
    %c0_i32 = arith.constant 0 : i32
    %c0_i32_0 = arith.constant 0 : i32
    %c0_i32_1 = arith.constant 0 : i32
    return %c0_i32, %c0_i32_0 : i32, i32
  }
  func.func @transform_9(%arg0: i32) -> (i32, i32) {
    %c0_i32 = arith.constant 0 : i32
    %c0_i32_0 = arith.constant 0 : i32
    return %arg0, %c0_i32 : i32, i32
  }
  func.func @transform_10(%arg0: i32) -> (i32, i32, i32) {
    %c0_i32 = arith.constant 0 : i32
    %c0_i32_0 = arith.constant 0 : i32
    %c0_i32_1 = arith.constant 0 : i32
    return %arg0, %c0_i32, %c0_i32_0 : i32, i32, i32
  }
  func.func @transform_11(%arg0: i32) -> (i32, i32, i32) {
    %c0_i32 = arith.constant 0 : i32
    %c0_i32_0 = arith.constant 0 : i32
    %c0_i32_1 = arith.constant 0 : i32
    return %arg0, %c0_i32, %c0_i32_0 : i32, i32, i32
  }
}

</mosaic_0001>

<llo_original>
// kernel: tpu_custom_call.1
$region0: #{tpu_custom_call.1}
  #allocation0 [shape = 'u32[]', space=smem, size = 0x4, offset = 0x4, fixed_abs, tag = 'smem constant byte address 0x4 - core index']
  #allocation1 [shape = 'u32[144,128]{1,0:T(1,128)}', space=vmem, size = 0x12000, scoped, tag = 'internal scratch']
  %s0 = inlined_call_operand.hbm [shape: s8[128,128], index: 0, kind: input, shape index: {}]
  %s1 = inlined_call_operand.vmem [shape: bf16[128,128], index: 1, kind: input, shape index: {}]
  %s2 = inlined_call_operand.vmem [shape: f32[128,1], index: 2, kind: input, shape index: {}]
  %s3 = inlined_call_operand.vmem [shape: f32[1,128], index: 3, kind: input, shape index: {}]
  %s4 = inlined_call_operand.vmem [shape: f32[1,128], index: 4, kind: input, shape index: {}]
  %s5 = inlined_call_operand.vmem [shape: bf16[128,128], index: 5, kind: input, shape index: {}]
  %s6 = inlined_call_operand.vmem [shape: f32[1,128], index: 6, kind: input, shape index: {}]
  %s7 = inlined_call_operand.hbm [shape: bf16[128,128], index: 7, kind: input, shape index: {}]
  %s8 = inlined_call_operand.vmem [shape: f32[1,128], index: 8, kind: input, shape index: {}]
  %s9 = inlined_call_operand.hbm [shape: bf16[128,128], index: 9, kind: output, shape index: {0}]
  %s10 = inlined_call_operand.hbm [shape: f32[1,1,128], index: 10, kind: output, shape index: {1}]
  %s11 = inlined_call_operand.hbm [shape: f32[1,1,128], index: 11, kind: output, shape index: {2}]
  %12 = xla_tuple %s9, %s10, %s11
  %s13 = sld [smem:[#allocation0]]
  $region70: #{tpu_custom_call.1} parent=0
    _
  %s15 = ssub.s32 1, %s13
  %s16 = scalar_select 0, %s15, %s13
  $region1: #{tpu_custom_call.1} parent=0
    #allocation2 [shape = 'u8[16384]{0}', space=vmem, size = 0x4000, scoped, tag = 'input window, operand 0, single buffered']
    #allocation3 [shape = 's32[1]{0}', space=sflag, size = 0x4, scoped, tag = 'scoped memory for tpu_custom_call.1']
    #allocation4 [shape = 's32[1]{0}', space=sflag, size = 0x4, scoped, tag = 'scoped memory for tpu_custom_call.1']
    #allocation5 [shape = 'u8[32768]{0}', space=vmem, size = 0x8000, scoped, tag = 'input window, operand 7, single buffered']
    #allocation6 [shape = 's32[1]{0}', space=sflag, size = 0x4, scoped, tag = 'scoped memory for tpu_custom_call.1']
    #allocation7 [shape = 'u8[32768]{0}', space=vmem, size = 0x8000, scoped, tag = 'output window, operand 0, single buffered']
    #allocation8 [shape = 'u8[512]{0}', space=vmem, size = 0x400, scoped, tag = 'output window, operand 1, single buffered']
    #allocation9 [shape = 's32[1]{0}', space=sflag, size = 0x4, scoped, tag = 'scoped memory for tpu_custom_call.1']
    #allocation10 [shape = 'u8[512]{0}', space=vmem, size = 0x400, scoped, tag = 'output window, operand 2, single buffered']
    %17 = vsyncpa [#allocation3], 0
    %18 = vsyncpa [#allocation6], 0
    %19 = vsyncpa [#allocation4], 0
    %20 = vsyncpa [#allocation9], 0
    // Predicated region
    $region2: #{tpu_custom_call.1} parent=1 // pred_check
      _
    $region3: #{tpu_custom_call.1} parent=1 // pred_check_branch
      %22 = sbr.rel (0) target = $region5
    $region4: #{tpu_custom_call.1} parent=1 // pred_region
      %s24 = ssub.s32 512, 512
      %25 = vsyncadd [#allocation3], %s24
      %s26 = sshll.u32 [#allocation2], 4
      %s27 = int_to_ptr.vmem [resolvable:$true] %s26
      %32 = dma.hbm_to_vmem [thread:$0]  %s0, 512, %s27, [#allocation3], 128, 128, 8
    $region5: #{tpu_custom_call.1} parent=1 // pred_fallthru
      _
    // Predicated region
    $region6: #{tpu_custom_call.1} parent=1 // pred_check
      _
    $region7: #{tpu_custom_call.1} parent=1 // pred_check_branch
      %34 = sbr.rel (0) target = $region9
    $region8: #{tpu_custom_call.1} parent=1 // pred_region
      _
    $region9: #{tpu_custom_call.1} parent=1 // pred_fallthru
      _
    // Predicated region
    $region10: #{tpu_custom_call.1} parent=1 // pred_check
      _
    $region11: #{tpu_custom_call.1} parent=1 // pred_check_branch
      %36 = sbr.rel (0) target = $region13
    $region12: #{tpu_custom_call.1} parent=1 // pred_region
      _
    $region13: #{tpu_custom_call.1} parent=1 // pred_fallthru
      _
    // Predicated region
    $region14: #{tpu_custom_call.1} parent=1 // pred_check
      _
    $region15: #{tpu_custom_call.1} parent=1 // pred_check_branch
      %38 = sbr.rel (0) target = $region17
    $region16: #{tpu_custom_call.1} parent=1 // pred_region
      _
    $region17: #{tpu_custom_call.1} parent=1 // pred_fallthru
      _
    // Predicated region
    $region18: #{tpu_custom_call.1} parent=1 // pred_check
      _
    $region19: #{tpu_custom_call.1} parent=1 // pred_check_branch
      %40 = sbr.rel (0) target = $region21
    $region20: #{tpu_custom_call.1} parent=1 // pred_region
      _
    $region21: #{tpu_custom_call.1} parent=1 // pred_fallthru
      _
    // Predicated region
    $region22: #{tpu_custom_call.1} parent=1 // pred_check
      _
    $region23: #{tpu_custom_call.1} parent=1 // pred_check_branch
      %42 = sbr.rel (0) target = $region25
    $region24: #{tpu_custom_call.1} parent=1 // pred_region
      _
    $region25: #{tpu_custom_call.1} parent=1 // pred_fallthru
      _
    // Predicated region
    $region26: #{tpu_custom_call.1} parent=1 // pred_check
      _
    $region27: #{tpu_custom_call.1} parent=1 // pred_check_branch
      %44 = sbr.rel (0) target = $region29
    $region28: #{tpu_custom_call.1} parent=1 // pred_region
      _
    $region29: #{tpu_custom_call.1} parent=1 // pred_fallthru
      _
    // Predicated region
    $region30: #{tpu_custom_call.1} parent=1 // pred_check
      _
    $region31: #{tpu_custom_call.1} parent=1 // pred_check_branch
      %46 = sbr.rel (0) target = $region33
    $region32: #{tpu_custom_call.1} parent=1 // pred_region
      %s48 = ssub.s32 1024, 1024
      %49 = vsyncadd [#allocation6], %s48
      %s50 = sshll.u32 [#allocation5], 4
      %s51 = int_to_ptr.vmem [resolvable:$true] %s50
      %56 = dma.hbm_to_vmem [thread:$0]  %s7, 1024, %s51, [#allocation6], 64, 64, 4
    $region33: #{tpu_custom_call.1} parent=1 // pred_fallthru
      _
    // Predicated region
    $region34: #{tpu_custom_call.1} parent=1 // pred_check
      _
    $region35: #{tpu_custom_call.1} parent=1 // pred_check_branch
      %58 = sbr.rel (0) target = $region37
    $region36: #{tpu_custom_call.1} parent=1 // pred_region
      _
    $region37: #{tpu_custom_call.1} parent=1 // pred_fallthru
      _
    // Predicated region
    $region38: #{tpu_custom_call.1} parent=1 // pred_check
      _
    $region39: #{tpu_custom_call.1} parent=1 // pred_check_branch
      %60 = sbr.rel (0) target = $region41
    $region40: #{tpu_custom_call.1} parent=1 // pred_region
      %61 = dma.done [#allocation3], 512
    $region41: #{tpu_custom_call.1} parent=1 // pred_fallthru
      _
    // Predicated region
    $region42: #{tpu_custom_call.1} parent=1 // pred_check
      _
    $region43: #{tpu_custom_call.1} parent=1 // pred_check_branch
      %63 = sbr.rel (0) target = $region45
    $region44: #{tpu_custom_call.1} parent=1 // pred_region
      %64 = dma.done [#allocation6], 1024
    $region45: #{tpu_custom_call.1} parent=1 // pred_fallthru
      _
    %v66 = vld [vmem:[#allocation2] sm:$0xff]
    %v67 = vld [vmem:[#allocation2 + $0x8] sm:$0xff]
    %v68 = vld [vmem:[#allocation2 + $0x10] sm:$0xff]
    %v69 = vld [vmem:[#allocation2 + $0x18] sm:$0xff]
    %v70 = vunpack.c.l.s8.bf16 %v66
    %v71 = vunpack.c.h.s8.bf16 %v66
    %v72 = vunpack.c.l.s8.bf16 %v67
    %v73 = vunpack.c.h.s8.bf16 %v67
    %v74 = vunpack.c.l.s8.bf16 %v68
    %v75 = vunpack.c.h.s8.bf16 %v68
    %v76 = vunpack.c.l.s8.bf16 %v69
    %v77 = vunpack.c.h.s8.bf16 %v69
    %v78 = vld [vmem:[%s1] sm:$0xf]
    %v79 = vld [vmem:[%s1 + $0x4] sm:$0xf]
    %v80 = vld [vmem:[%s1 + $0x8] sm:$0xf]
    %v81 = vld [vmem:[%s1 + $0xc] sm:$0xf]
    %v82 = vld [vmem:[%s1 + $0x10] sm:$0xf]
    %v83 = vld [vmem:[%s1 + $0x14] sm:$0xf]
    %v84 = vld [vmem:[%s1 + $0x18] sm:$0xf]
    %v85 = vld [vmem:[%s1 + $0x1c] sm:$0xf]
    %v86 = vld [vmem:[%s1 + $0x20] sm:$0xf]
    %v87 = vld [vmem:[%s1 + $0x24] sm:$0xf]
    %v88 = vld [vmem:[%s1 + $0x28] sm:$0xf]
    %v89 = vld [vmem:[%s1 + $0x2c] sm:$0xf]
    %v90 = vld [vmem:[%s1 + $0x30] sm:$0xf]
    %v91 = vld [vmem:[%s1 + $0x34] sm:$0xf]
    %v92 = vld [vmem:[%s1 + $0x38] sm:$0xf]
    %v93 = vld [vmem:[%s1 + $0x3c] sm:$0xf]
    %v110 = vunpack.c.l.b16 %v78
    %v111 = vunpack.c.l.b16 %v79
    %v112 = vunpack.c.l.b16 %v80
    %v113 = vunpack.c.l.b16 %v81
    %v114 = vunpack.c.l.b16 %v82
    %v115 = vunpack.c.l.b16 %v83
    %v116 = vunpack.c.l.b16 %v84
    %v117 = vunpack.c.l.b16 %v85
    %v118 = vunpack.c.l.b16 %v86
    %v119 = vunpack.c.l.b16 %v87
    %v120 = vunpack.c.l.b16 %v88
    %v121 = vunpack.c.l.b16 %v89
    %v122 = vunpack.c.l.b16 %v90
    %v123 = vunpack.c.l.b16 %v91
    %v124 = vunpack.c.l.b16 %v92
    %v125 = vunpack.c.l.b16 %v93
    %v126 = vpack.c.b16 %v111, %v110
    %v127 = vpack.c.b16 %v113, %v112
    %v128 = vpack.c.b16 %v115, %v114
    %v129 = vpack.c.b16 %v117, %v116
    %v130 = vpack.c.b16 %v119, %v118
    %v131 = vpack.c.b16 %v121, %v120
    %v132 = vpack.c.b16 %v123, %v122
    %v133 = vpack.c.b16 %v125, %v124
    %142 = vmatprep.subr.bf16.mxu0 0
    %143 = vmatpush1.bf16.msra.mxu0 %v126
    %144 = vmatprep.subr.bf16.mxu0 0
    %145 = vmatpush1.bf16.msra.mxu0 %v127
    %146 = vmatprep.subr.bf16.mxu0 0
    %147 = vmatpush1.bf16.msra.mxu0 %v128
    %148 = vmatprep.subr.bf16.mxu0 0
    %149 = vmatpush1.bf16.msra.mxu0 %v129
    %150 = vmatprep.subr.bf16.mxu0 0
    %151 = vmatpush1.bf16.msra.mxu0 %v130
    %152 = vmatprep.subr.bf16.mxu0 0
    %153 = vmatpush1.bf16.msra.mxu0 %v131
    %154 = vmatprep.subr.bf16.mxu0 0
    %155 = vmatpush1.bf16.msra.mxu0 %v132
    %156 = vmatprep.subr.bf16.mxu0 0
    %157 = vmatpush1.bf16.msra.mxu0 %v133
    %158 = vmatprep.subr.bf16.mxu0 0
    %159 = vmatpush1.bf16.msra.mxu0 0
    %160 = vmatprep.subr.bf16.mxu0 0
    %161 = vmatpush1.bf16.msra.mxu0 0
    %162 = vmatprep.subr.bf16.mxu0 0
    %163 = vmatpush1.bf16.msra.mxu0 0
    %164 = vmatprep.subr.bf16.mxu0 0
    %165 = vmatpush1.bf16.msra.mxu0 0
    %166 = vmatprep.subr.bf16.mxu0 0
    %167 = vmatpush1.bf16.msra.mxu0 0
    %168 = vmatprep.subr.bf16.mxu0 0
    %169 = vmatpush1.bf16.msra.mxu0 0
    %170 = vmatprep.subr.bf16.mxu0 0
    %171 = vmatpush1.bf16.msra.mxu0 0
    %172 = vmatprep.subr.bf16.mxu0 0
    %173 = vmatpush1.bf16.msra.mxu0 0
    %174 = vmatprep.mubr.bf16.mxu0 0
    %175 = vmatmul.mubr.bf16.gmra.mrb[0].mxu0 %v70
    %v176 = vpop.f32.mrb[0].mxu0
    %v177 = vadd.f32 0.0, %v176
    %v178 = vpop.f32.mrb[0].mxu0
    %v179 = vpop.f32.mrb[0].mxu0
    %v180 = vadd.f32 0.0, %v179
    %v181 = vpop.f32.mrb[0].mxu0
    %182 = vmatprep.mubr.bf16.mxu0 0
    %183 = vmatmul.mubr.bf16.gmra.mrb[0].mxu0 %v71
    %v184 = vpop.f32.mrb[0].mxu0
    %v185 = vadd.f32 0.0, %v184
    %v186 = vpop.f32.mrb[0].mxu0
    %v187 = vpop.f32.mrb[0].mxu0
    %v188 = vadd.f32 0.0, %v187
    %v189 = vpop.f32.mrb[0].mxu0
    %190 = vmatprep.mubr.bf16.mxu0 0
    %191 = vmatmul.mubr.bf16.gmra.mrb[0].mxu0 %v72
    %v192 = vpop.f32.mrb[0].mxu0
    %v193 = vadd.f32 0.0, %v192
    %v194 = vpop.f32.mrb[0].mxu0
    %v195 = vpop.f32.mrb[0].mxu0
    %v196 = vadd.f32 0.0, %v195
    %v197 = vpop.f32.mrb[0].mxu0
    %198 = vmatprep.mubr.bf16.mxu0 0
    %199 = vmatmul.mubr.bf16.gmra.mrb[0].mxu0 %v73
    %v200 = vpop.f32.mrb[0].mxu0
    %v201 = vadd.f32 0.0, %v200
    %v202 = vpop.f32.mrb[0].mxu0
    %v203 = vpop.f32.mrb[0].mxu0
    %v204 = vadd.f32 0.0, %v203
    %v205 = vpop.f32.mrb[0].mxu0
    %206 = vmatprep.mubr.bf16.mxu0 0
    %207 = vmatmul.mubr.bf16.gmra.mrb[0].mxu0 %v74
    %v208 = vpop.f32.mrb[0].mxu0
    %v209 = vadd.f32 0.0, %v208
    %v210 = vpop.f32.mrb[0].mxu0
    %v211 = vpop.f32.mrb[0].mxu0
    %v212 = vadd.f32 0.0, %v211
    %v213 = vpop.f32.mrb[0].mxu0
    %214 = vmatprep.mubr.bf16.mxu0 0
    %215 = vmatmul.mubr.bf16.gmra.mrb[0].mxu0 %v75
    %v216 = vpop.f32.mrb[0].mxu0
    %v217 = vadd.f32 0.0, %v216
    %v218 = vpop.f32.mrb[0].mxu0
    %v219 = vpop.f32.mrb[0].mxu0
    %v220 = vadd.f32 0.0, %v219
    %v221 = vpop.f32.mrb[0].mxu0
    %222 = vmatprep.mubr.bf16.mxu0 0
    %223 = vmatmul.mubr.bf16.gmra.mrb[0].mxu0 %v76
    %v224 = vpop.f32.mrb[0].mxu0
    %v225 = vadd.f32 0.0, %v224
    %v226 = vpop.f32.mrb[0].mxu0
    %v227 = vpop.f32.mrb[0].mxu0
    %v228 = vadd.f32 0.0, %v227
    %v229 = vpop.f32.mrb[0].mxu0
    %230 = vmatprep.mubr.bf16.mxu0 0
    %231 = vmatmul.mubr.bf16.gmra.mrb[0].mxu0 %v77
    %v232 = vpop.f32.mrb[0].mxu0
    %v233 = vadd.f32 0.0, %v232
    %v234 = vpop.f32.mrb[0].mxu0
    %v235 = vpop.f32.mrb[0].mxu0
    %v236 = vadd.f32 0.0, %v235
    %v237 = vpop.f32.mrb[0].mxu0
    %238 = vdwg.mxu0
    %v239 = vld [vmem:[%s2] sm:$0xff]
    %v240 = vld [vmem:[%s2 + $0x8] sm:$0xff]
    %v241 = vld [vmem:[%s2 + $0x10] sm:$0xff]
    %v242 = vld [vmem:[%s2 + $0x18] sm:$0xff]
    %v243 = vld [vmem:[%s2 + $0x20] sm:$0xff]
    %v244 = vld [vmem:[%s2 + $0x28] sm:$0xff]
    %v245 = vld [vmem:[%s2 + $0x30] sm:$0xff]
    %v246 = vld [vmem:[%s2 + $0x38] sm:$0xff]
    %v247 = vld [vmem:[%s2 + $0x40] sm:$0xff]
    %v248 = vld [vmem:[%s2 + $0x48] sm:$0xff]
    %v249 = vld [vmem:[%s2 + $0x50] sm:$0xff]
    %v250 = vld [vmem:[%s2 + $0x58] sm:$0xff]
    %v251 = vld [vmem:[%s2 + $0x60] sm:$0xff]
    %v252 = vld [vmem:[%s2 + $0x68] sm:$0xff]
    %v253 = vld [vmem:[%s2 + $0x70] sm:$0xff]
    %v254 = vld [vmem:[%s2 + $0x78] sm:$0xff]
    %v255 = vld [vmem:[%s3] sm:$0x1]
    %257 = vset.pattern.permute.xlu0 0
    %258 = vperm.xlu0 %257, %v239
    %v259 = vpop.permute.xlu0 %258
    %262 = vset.pattern.permute.xlu0 0
    %263 = vperm.xlu0 %262, %v240
    %v264 = vpop.permute.xlu0 %263
    %267 = vset.pattern.permute.xlu0 0
    %268 = vperm.xlu0 %267, %v241
    %v269 = vpop.permute.xlu0 %268
    %272 = vset.pattern.permute.xlu0 0
    %273 = vperm.xlu0 %272, %v242
    %v274 = vpop.permute.xlu0 %273
    %277 = vset.pattern.permute.xlu0 0
    %278 = vperm.xlu0 %277, %v243
    %v279 = vpop.permute.xlu0 %278
    %282 = vset.pattern.permute.xlu0 0
    %283 = vperm.xlu0 %282, %v244
    %v284 = vpop.permute.xlu0 %283
    %287 = vset.pattern.permute.xlu0 0
    %288 = vperm.xlu0 %287, %v245
    %v289 = vpop.permute.xlu0 %288
    %292 = vset.pattern.permute.xlu0 0
    %293 = vperm.xlu0 %292, %v246
    %v294 = vpop.permute.xlu0 %293
    %297 = vset.pattern.permute.xlu0 0
    %298 = vperm.xlu0 %297, %v247
    %v299 = vpop.permute.xlu0 %298
    %302 = vset.pattern.permute.xlu0 0
    %303 = vperm.xlu0 %302, %v248
    %v304 = vpop.permute.xlu0 %303
    %307 = vset.pattern.permute.xlu0 0
    %308 = vperm.xlu0 %307, %v249
    %v309 = vpop.permute.xlu0 %308
    %312 = vset.pattern.permute.xlu0 0
    %313 = vperm.xlu0 %312, %v250
    %v314 = vpop.permute.xlu0 %313
    %317 = vset.pattern.permute.xlu0 0
    %318 = vperm.xlu0 %317, %v251
    %v319 = vpop.permute.xlu0 %318
    %322 = vset.pattern.permute.xlu0 0
    %323 = vperm.xlu0 %322, %v252
    %v324 = vpop.permute.xlu0 %323
    %327 = vset.pattern.permute.xlu0 0
    %328 = vperm.xlu0 %327, %v253
    %v329 = vpop.permute.xlu0 %328
    %332 = vset.pattern.permute.xlu0 0
    %333 = vperm.xlu0 %332, %v254
    %v334 = vpop.permute.xlu0 %333
    %v337 = vlaneseq
    %v338 = vshrl.u32 %v337, 7
    %v339 = vsub.s32 0, %v338
    %v340 = vrot.slane %v255, %v339
    %v342 = vmul.f32 %v259, %v340
    %v343 = vmul.f32 %v264, %v340
    %v344 = vmul.f32 %v269, %v340
    %v345 = vmul.f32 %v274, %v340
    %v346 = vmul.f32 %v279, %v340
    %v347 = vmul.f32 %v284, %v340
    %v348 = vmul.f32 %v289, %v340
    %v349 = vmul.f32 %v294, %v340
    %v350 = vmul.f32 %v299, %v340
    %v351 = vmul.f32 %v304, %v340
    %v352 = vmul.f32 %v309, %v340
    %v353 = vmul.f32 %v314, %v340
    %v354 = vmul.f32 %v319, %v340
    %v355 = vmul.f32 %v324, %v340
    %v356 = vmul.f32 %v329, %v340
    %v357 = vmul.f32 %v334, %v340
    %v358 = vsub.f32 %v177, %v342
    %v359 = vsub.f32 %v180, %v343
    %v360 = vsub.f32 %v185, %v344
    %v361 = vsub.f32 %v188, %v345
    %v362 = vsub.f32 %v193, %v346
    %v363 = vsub.f32 %v196, %v347
    %v364 = vsub.f32 %v201, %v348
    %v365 = vsub.f32 %v204, %v349
    %v366 = vsub.f32 %v209, %v350
    %v367 = vsub.f32 %v212, %v351
    %v368 = vsub.f32 %v217, %v352
    %v369 = vsub.f32 %v220, %v353
    %v370 = vsub.f32 %v225, %v354
    %v371 = vsub.f32 %v228, %v355
    %v372 = vsub.f32 %v233, %v356
    %v373 = vsub.f32 %v236, %v357
    %v374 = vld [vmem:[%s4] sm:$0x1]
    %v376 = vlaneseq
    %v377 = vshrl.u32 %v376, 7
    %v378 = vsub.s32 0, %v377
    %v379 = vrot.slane %v374, %v378
    %v381 = vmul.f32 %v358, %v379
    %v382 = vmul.f32 %v359, %v379
    %v383 = vmul.f32 %v360, %v379
    %v384 = vmul.f32 %v361, %v379
    %v385 = vmul.f32 %v362, %v379
    %v386 = vmul.f32 %v363, %v379
    %v387 = vmul.f32 %v364, %v379
    %v388 = vmul.f32 %v365, %v379
    %v389 = vmul.f32 %v366, %v379
    %v390 = vmul.f32 %v367, %v379
    %v391 = vmul.f32 %v368, %v379
    %v392 = vmul.f32 %v369, %v379
    %v393 = vmul.f32 %v370, %v379
    %v394 = vmul.f32 %v371, %v379
    %v395 = vmul.f32 %v372, %v379
    %v396 = vmul.f32 %v373, %v379
    %v397 = vpack.c.bf16 %v382, %v381
    %v398 = vpack.c.bf16 %v384, %v383
    %v399 = vpack.c.bf16 %v386, %v385
    %v400 = vpack.c.bf16 %v388, %v387
    %v401 = vpack.c.bf16 %v390, %v389
    %v402 = vpack.c.bf16 %v392, %v391
    %v403 = vpack.c.bf16 %v394, %v393
    %v404 = vpack.c.bf16 %v396, %v395
    %v405 = vld [vmem:[%s5] sm:$0xf]
    %v406 = vld [vmem:[%s5 + $0x4] sm:$0xf]
    %v407 = vld [vmem:[%s5 + $0x8] sm:$0xf]
    %v408 = vld [vmem:[%s5 + $0xc] sm:$0xf]
    %v409 = vld [vmem:[%s5 + $0x10] sm:$0xf]
    %v410 = vld [vmem:[%s5 + $0x14] sm:$0xf]
    %v411 = vld [vmem:[%s5 + $0x18] sm:$0xf]
    %v412 = vld [vmem:[%s5 + $0x1c] sm:$0xf]
    %v413 = vld [vmem:[%s5 + $0x20] sm:$0xf]
    %v414 = vld [vmem:[%s5 + $0x24] sm:$0xf]
    %v415 = vld [vmem:[%s5 + $0x28] sm:$0xf]
    %v416 = vld [vmem:[%s5 + $0x2c] sm:$0xf]
    %v417 = vld [vmem:[%s5 + $0x30] sm:$0xf]
    %v418 = vld [vmem:[%s5 + $0x34] sm:$0xf]
    %v419 = vld [vmem:[%s5 + $0x38] sm:$0xf]
    %v420 = vld [vmem:[%s5 + $0x3c] sm:$0xf]
    %v421 = vld [vmem:[%s6] sm:$0x1]
    %v423 = vlaneseq
    %v424 = vshrl.u32 %v423, 7
    %v425 = vsub.s32 0, %v424
    %v426 = vrot.slane %v421, %v425
    %v444 = vunpack.c.l.b16 %v405
    %v445 = vunpack.c.l.b16 %v406
    %v446 = vunpack.c.l.b16 %v407
    %v447 = vunpack.c.l.b16 %v408
    %v448 = vunpack.c.l.b16 %v409
    %v449 = vunpack.c.l.b16 %v410
    %v450 = vunpack.c.l.b16 %v411
    %v451 = vunpack.c.l.b16 %v412
    %v452 = vunpack.c.l.b16 %v413
    %v453 = vunpack.c.l.b16 %v414
    %v454 = vunpack.c.l.b16 %v415
    %v455 = vunpack.c.l.b16 %v416
    %v456 = vunpack.c.l.b16 %v417
    %v457 = vunpack.c.l.b16 %v418
    %v458 = vunpack.c.l.b16 %v419
    %v459 = vunpack.c.l.b16 %v420
    %v460 = vpack.c.b16 %v445, %v444
    %v461 = vpack.c.b16 %v447, %v446
    %v462 = vpack.c.b16 %v449, %v448
    %v463 = vpack.c.b16 %v451, %v450
    %v464 = vpack.c.b16 %v453, %v452
    %v465 = vpack.c.b16 %v455, %v454
    %v466 = vpack.c.b16 %v457, %v456
    %v467 = vpack.c.b16 %v459, %v458
    %476 = vmatprep.subr.bf16.mxu0 0
    %477 = vmatpush1.bf16.msra.mxu0 %v460
    %478 = vmatprep.subr.bf16.mxu0 0
    %479 = vmatpush1.bf16.msra.mxu0 %v461
    %480 = vmatprep.subr.bf16.mxu0 0
    %481 = vmatpush1.bf16.msra.mxu0 %v462
    %482 = vmatprep.subr.bf16.mxu0 0
    %483 = vmatpush1.bf16.msra.mxu0 %v463
    %484 = vmatprep.subr.bf16.mxu0 0
    %485 = vmatpush1.bf16.msra.mxu0 %v464
    %486 = vmatprep.subr.bf16.mxu0 0
    %487 = vmatpush1.bf16.msra.mxu0 %v465
    %488 = vmatprep.subr.bf16.mxu0 0
    %489 = vmatpush1.bf16.msra.mxu0 %v466
    %490 = vmatprep.subr.bf16.mxu0 0
    %491 = vmatpush1.bf16.msra.mxu0 %v467
    %492 = vmatprep.subr.bf16.mxu0 0
    %493 = vmatpush1.bf16.msra.mxu0 0
    %494 = vmatprep.subr.bf16.mxu0 0
    %495 = vmatpush1.bf16.msra.mxu0 0
    %496 = vmatprep.subr.bf16.mxu0 0
    %497 = vmatpush1.bf16.msra.mxu0 0
    %498 = vmatprep.subr.bf16.mxu0 0
    %499 = vmatpush1.bf16.msra.mxu0 0
    %500 = vmatprep.subr.bf16.mxu0 0
    %501 = vmatpush1.bf16.msra.mxu0 0
    %502 = vmatprep.subr.bf16.mxu0 0
    %503 = vmatpush1.bf16.msra.mxu0 0
    %504 = vmatprep.subr.bf16.mxu0 0
    %505 = vmatpush1.bf16.msra.mxu0 0
    %506 = vmatprep.subr.bf16.mxu0 0
    %507 = vmatpush1.bf16.msra.mxu0 0
    %508 = vmatprep.mubr.bf16.mxu0 0
    %509 = vmatmul.mubr.bf16.gmra.mrb[0].mxu0 %v397
    %v510 = vpop.f32.mrb[0].mxu0
    %v511 = vadd.f32 %v426, %v510
    %v512 = vpop.f32.mrb[0].mxu0
    %v513 = vpop.f32.mrb[0].mxu0
    %v514 = vadd.f32 %v426, %v513
    %v515 = vpop.f32.mrb[0].mxu0
    %516 = vmatprep.mubr.bf16.mxu0 0
    %517 = vmatmul.mubr.bf16.gmra.mrb[0].mxu0 %v398
    %v518 = vpop.f32.mrb[0].mxu0
    %v519 = vadd.f32 %v426, %v518
    %v520 = vpop.f32.mrb[0].mxu0
    %v521 = vpop.f32.mrb[0].mxu0
    %v522 = vadd.f32 %v426, %v521
    %v523 = vpop.f32.mrb[0].mxu0
    %524 = vmatprep.mubr.bf16.mxu0 0
    %525 = vmatmul.mubr.bf16.gmra.mrb[0].mxu0 %v399
    %v526 = vpop.f32.mrb[0].mxu0
    %v527 = vadd.f32 %v426, %v526
    %v528 = vpop.f32.mrb[0].mxu0
    %v529 = vpop.f32.mrb[0].mxu0
    %v530 = vadd.f32 %v426, %v529
    %v531 = vpop.f32.mrb[0].mxu0
    %532 = vmatprep.mubr.bf16.mxu0 0
    %533 = vmatmul.mubr.bf16.gmra.mrb[0].mxu0 %v400
    %v534 = vpop.f32.mrb[0].mxu0
    %v535 = vadd.f32 %v426, %v534
    %v536 = vpop.f32.mrb[0].mxu0
    %v537 = vpop.f32.mrb[0].mxu0
    %v538 = vadd.f32 %v426, %v537
    %v539 = vpop.f32.mrb[0].mxu0
    %540 = vmatprep.mubr.bf16.mxu0 0
    %541 = vmatmul.mubr.bf16.gmra.mrb[0].mxu0 %v401
    %v542 = vpop.f32.mrb[0].mxu0
    %v543 = vadd.f32 %v426, %v542
    %v544 = vpop.f32.mrb[0].mxu0
    %v545 = vpop.f32.mrb[0].mxu0
    %v546 = vadd.f32 %v426, %v545
    %v547 = vpop.f32.mrb[0].mxu0
    %548 = vmatprep.mubr.bf16.mxu0 0
    %549 = vmatmul.mubr.bf16.gmra.mrb[0].mxu0 %v402
    %v550 = vpop.f32.mrb[0].mxu0
    %v551 = vadd.f32 %v426, %v550
    %v552 = vpop.f32.mrb[0].mxu0
    %v553 = vpop.f32.mrb[0].mxu0
    %v554 = vadd.f32 %v426, %v553
    %v555 = vpop.f32.mrb[0].mxu0
    %556 = vmatprep.mubr.bf16.mxu0 0
    %557 = vmatmul.mubr.bf16.gmra.mrb[0].mxu0 %v403
    %v558 = vpop.f32.mrb[0].mxu0
    %v559 = vadd.f32 %v426, %v558
    %v560 = vpop.f32.mrb[0].mxu0
    %v561 = vpop.f32.mrb[0].mxu0
    %v562 = vadd.f32 %v426, %v561
    %v563 = vpop.f32.mrb[0].mxu0
    %564 = vmatprep.mubr.bf16.mxu0 0
    %565 = vmatmul.mubr.bf16.gmra.mrb[0].mxu0 %v404
    %v566 = vpop.f32.mrb[0].mxu0
    %v567 = vadd.f32 %v426, %v566
    %v568 = vpop.f32.mrb[0].mxu0
    %v569 = vpop.f32.mrb[0].mxu0
    %v570 = vadd.f32 %v426, %v569
    %v571 = vpop.f32.mrb[0].mxu0
    %572 = vdwg.mxu0
    %v573 = vmax.f32 %v511, 0.0
    %v574 = vmax.f32 %v514, 0.0
    %v575 = vmax.f32 %v519, 0.0
    %v576 = vmax.f32 %v522, 0.0
    %v577 = vmax.f32 %v527, 0.0
    %v578 = vmax.f32 %v530, 0.0
    %v579 = vmax.f32 %v535, 0.0
    %v580 = vmax.f32 %v538, 0.0
    %v581 = vmax.f32 %v543, 0.0
    %v582 = vmax.f32 %v546, 0.0
    %v583 = vmax.f32 %v551, 0.0
    %v584 = vmax.f32 %v554, 0.0
    %v585 = vmax.f32 %v559, 0.0
    %v586 = vmax.f32 %v562, 0.0
    %v587 = vmax.f32 %v567, 0.0
    %v588 = vmax.f32 %v570, 0.0
    %v589 = vpack.c.bf16 %v574, %v573
    %v590 = vpack.c.bf16 %v576, %v575
    %v591 = vpack.c.bf16 %v578, %v577
    %v592 = vpack.c.bf16 %v580, %v579
    %v593 = vpack.c.bf16 %v582, %v581
    %v594 = vpack.c.bf16 %v584, %v583
    %v595 = vpack.c.bf16 %v586, %v585
    %v596 = vpack.c.bf16 %v588, %v587
    %v597 = vld [vmem:[#allocation5] sm:$0xf]
    %v598 = vld [vmem:[#allocation5 + $0x4] sm:$0xf]
    %v599 = vld [vmem:[#allocation5 + $0x8] sm:$0xf]
    %v600 = vld [vmem:[#allocation5 + $0xc] sm:$0xf]
    %v601 = vld [vmem:[#allocation5 + $0x10] sm:$0xf]
    %v602 = vld [vmem:[#allocation5 + $0x14] sm:$0xf]
    %v603 = vld [vmem:[#allocation5 + $0x18] sm:$0xf]
    %v604 = vld [vmem:[#allocation5 + $0x1c] sm:$0xf]
    %v605 = vld [vmem:[#allocation5 + $0x20] sm:$0xf]
    %v606 = vld [vmem:[#allocation5 + $0x24] sm:$0xf]
    %v607 = vld [vmem:[#allocation5 + $0x28] sm:$0xf]
    %v608 = vld [vmem:[#allocation5 + $0x2c] sm:$0xf]
    %v609 = vld [vmem:[#allocation5 + $0x30] sm:$0xf]
    %v610 = vld [vmem:[#allocation5 + $0x34] sm:$0xf]
    %v611 = vld [vmem:[#allocation5 + $0x38] sm:$0xf]
    %v612 = vld [vmem:[#allocation5 + $0x3c] sm:$0xf]
    %v613 = vld [vmem:[%s8] sm:$0x1]
    %v615 = vlaneseq
    %v616 = vshrl.u32 %v615, 7
    %v617 = vsub.s32 0, %v616
    %v618 = vrot.slane %v613, %v617
    %v636 = vunpack.c.l.b16 %v597
    %v637 = vunpack.c.l.b16 %v598
    %v638 = vunpack.c.l.b16 %v599
    %v639 = vunpack.c.l.b16 %v600
    %v640 = vunpack.c.l.b16 %v601
    %v641 = vunpack.c.l.b16 %v602
    %v642 = vunpack.c.l.b16 %v603
    %v643 = vunpack.c.l.b16 %v604
    %v644 = vunpack.c.l.b16 %v605
    %v645 = vunpack.c.l.b16 %v606
    %v646 = vunpack.c.l.b16 %v607
    %v647 = vunpack.c.l.b16 %v608
    %v648 = vunpack.c.l.b16 %v609
    %v649 = vunpack.c.l.b16 %v610
    %v650 = vunpack.c.l.b16 %v611
    %v651 = vunpack.c.l.b16 %v612
    %v652 = vpack.c.b16 %v637, %v636
    %v653 = vpack.c.b16 %v639, %v638
    %v654 = vpack.c.b16 %v641, %v640
    %v655 = vpack.c.b16 %v643, %v642
    %v656 = vpack.c.b16 %v645, %v644
    %v657 = vpack.c.b16 %v647, %v646
    %v658 = vpack.c.b16 %v649, %v648
    %v659 = vpack.c.b16 %v651, %v650
    %668 = vmatprep.subr.bf16.mxu0 0
    %669 = vmatpush1.bf16.msra.mxu0 %v652
    %670 = vmatprep.subr.bf16.mxu0 0
    %671 = vmatpush1.bf16.msra.mxu0 %v653
    %672 = vmatprep.subr.bf16.mxu0 0
    %673 = vmatpush1.bf16.msra.mxu0 %v654
    %674 = vmatprep.subr.bf16.mxu0 0
    %675 = vmatpush1.bf16.msra.mxu0 %v655
    %676 = vmatprep.subr.bf16.mxu0 0
    %677 = vmatpush1.bf16.msra.mxu0 %v656
    %678 = vmatprep.subr.bf16.mxu0 0
    %679 = vmatpush1.bf16.msra.mxu0 %v657
    %680 = vmatprep.subr.bf16.mxu0 0
    %681 = vmatpush1.bf16.msra.mxu0 %v658
    %682 = vmatprep.subr.bf16.mxu0 0
    %683 = vmatpush1.bf16.msra.mxu0 %v659
    %684 = vmatprep.subr.bf16.mxu0 0
    %685 = vmatpush1.bf16.msra.mxu0 0
    %686 = vmatprep.subr.bf16.mxu0 0
    %687 = vmatpush1.bf16.msra.mxu0 0
    %688 = vmatprep.subr.bf16.mxu0 0
    %689 = vmatpush1.bf16.msra.mxu0 0
    %690 = vmatprep.subr.bf16.mxu0 0
    %691 = vmatpush1.bf16.msra.mxu0 0
    %692 = vmatprep.subr.bf16.mxu0 0
    %693 = vmatpush1.bf16.msra.mxu0 0
    %694 = vmatprep.subr.bf16.mxu0 0
    %695 = vmatpush1.bf16.msra.mxu0 0
    %696 = vmatprep.subr.bf16.mxu0 0
    %697 = vmatpush1.bf16.msra.mxu0 0
    %698 = vmatprep.subr.bf16.mxu0 0
    %699 = vmatpush1.bf16.msra.mxu0 0
    %700 = vmatprep.mubr.bf16.mxu0 0
    %701 = vmatmul.mubr.bf16.gmra.mrb[0].mxu0 %v589
    %v702 = vpop.f32.mrb[0].mxu0
    %v703 = vadd.f32 %v618, %v702
    %v704 = vpop.f32.mrb[0].mxu0
    %v705 = vpop.f32.mrb[0].mxu0
    %v706 = vadd.f32 %v618, %v705
    %v707 = vpop.f32.mrb[0].mxu0
    %708 = vmatprep.mubr.bf16.mxu0 0
    %709 = vmatmul.mubr.bf16.gmra.mrb[0].mxu0 %v590
    %v710 = vpop.f32.mrb[0].mxu0
    %v711 = vadd.f32 %v618, %v710
    %v712 = vpop.f32.mrb[0].mxu0
    %v713 = vpop.f32.mrb[0].mxu0
    %v714 = vadd.f32 %v618, %v713
    %v715 = vpop.f32.mrb[0].mxu0
    %716 = vmatprep.mubr.bf16.mxu0 0
    %717 = vmatmul.mubr.bf16.gmra.mrb[0].mxu0 %v591
    %v718 = vpop.f32.mrb[0].mxu0
    %v719 = vadd.f32 %v618, %v718
    %v720 = vpop.f32.mrb[0].mxu0
    %v721 = vpop.f32.mrb[0].mxu0
    %v722 = vadd.f32 %v618, %v721
    %v723 = vpop.f32.mrb[0].mxu0
    %724 = vmatprep.mubr.bf16.mxu0 0
    %725 = vmatmul.mubr.bf16.gmra.mrb[0].mxu0 %v592
    %v726 = vpop.f32.mrb[0].mxu0
    %v727 = vadd.f32 %v618, %v726
    %v728 = vpop.f32.mrb[0].mxu0
    %v729 = vpop.f32.mrb[0].mxu0
    %v730 = vadd.f32 %v618, %v729
    %v731 = vpop.f32.mrb[0].mxu0
    %732 = vmatprep.mubr.bf16.mxu0 0
    %733 = vmatmul.mubr.bf16.gmra.mrb[0].mxu0 %v593
    %v734 = vpop.f32.mrb[0].mxu0
    %v735 = vadd.f32 %v618, %v734
    %v736 = vpop.f32.mrb[0].mxu0
    %v737 = vpop.f32.mrb[0].mxu0
    %v738 = vadd.f32 %v618, %v737
    %v739 = vpop.f32.mrb[0].mxu0
    %740 = vmatprep.mubr.bf16.mxu0 0
    %741 = vmatmul.mubr.bf16.gmra.mrb[0].mxu0 %v594
    %v742 = vpop.f32.mrb[0].mxu0
    %v743 = vadd.f32 %v618, %v742
    %v744 = vpop.f32.mrb[0].mxu0
    %v745 = vpop.f32.mrb[0].mxu0
    %v746 = vadd.f32 %v618, %v745
    %v747 = vpop.f32.mrb[0].mxu0
    %748 = vmatprep.mubr.bf16.mxu0 0
    %749 = vmatmul.mubr.bf16.gmra.mrb[0].mxu0 %v595
    %v750 = vpop.f32.mrb[0].mxu0
    %v751 = vadd.f32 %v618, %v750
    %v752 = vpop.f32.mrb[0].mxu0
    %v753 = vpop.f32.mrb[0].mxu0
    %v754 = vadd.f32 %v618, %v753
    %v755 = vpop.f32.mrb[0].mxu0
    %756 = vmatprep.mubr.bf16.mxu0 0
    %757 = vmatmul.mubr.bf16.gmra.mrb[0].mxu0 %v596
    %v758 = vpop.f32.mrb[0].mxu0
    %v759 = vadd.f32 %v618, %v758
    %v760 = vpop.f32.mrb[0].mxu0
    %v761 = vpop.f32.mrb[0].mxu0
    %v762 = vadd.f32 %v618, %v761
    %v763 = vpop.f32.mrb[0].mxu0
    %764 = vdwg.mxu0
    %v765 = vmax.f32 %v703, 0.0
    %v766 = vmax.f32 %v706, 0.0
    %v767 = vmax.f32 %v711, 0.0
    %v768 = vmax.f32 %v714, 0.0
    %v769 = vmax.f32 %v719, 0.0
    %v770 = vmax.f32 %v722, 0.0
    %v771 = vmax.f32 %v727, 0.0
    %v772 = vmax.f32 %v730, 0.0
    %v773 = vmax.f32 %v735, 0.0
    %v774 = vmax.f32 %v738, 0.0
    %v775 = vmax.f32 %v743, 0.0
    %v776 = vmax.f32 %v746, 0.0
    %v777 = vmax.f32 %v751, 0.0
    %v778 = vmax.f32 %v754, 0.0
    %v779 = vmax.f32 %v759, 0.0
    %v780 = vmax.f32 %v762, 0.0
    %v781 = vpack.c.bf16 %v766, %v765
    %v782 = vpack.c.bf16 %v768, %v767
    %v783 = vpack.c.bf16 %v770, %v769
    %v784 = vpack.c.bf16 %v772, %v771
    %v785 = vpack.c.bf16 %v774, %v773
    %v786 = vpack.c.bf16 %v776, %v775
    %v787 = vpack.c.bf16 %v778, %v777
    %v788 = vpack.c.bf16 %v780, %v779
    %v797 = vunpack.c.l.b16 %v781
    %v798 = vunpack.c.h.b16 %v781
    %v799 = vunpack.c.l.b16 %v782
    %v800 = vunpack.c.h.b16 %v782
    %v801 = vunpack.c.l.b16 %v783
    %v802 = vunpack.c.h.b16 %v783
    %v803 = vunpack.c.l.b16 %v784
    %v804 = vunpack.c.h.b16 %v784
    %v805 = vunpack.c.l.b16 %v785
    %v806 = vunpack.c.h.b16 %v785
    %v807 = vunpack.c.l.b16 %v786
    %v808 = vunpack.c.h.b16 %v786
    %v809 = vunpack.c.l.b16 %v787
    %v810 = vunpack.c.h.b16 %v787
    %v811 = vunpack.c.l.b16 %v788
    %v812 = vunpack.c.h.b16 %v788
    %v813 = vpack.c.b16 %v797, %v797
    %v814 = vpack.c.b16 %v798, %v798
    %v815 = vpack.c.b16 %v799, %v799
    %v816 = vpack.c.b16 %v800, %v800
    %v817 = vpack.c.b16 %v801, %v801
    %v818 = vpack.c.b16 %v802, %v802
    %v819 = vpack.c.b16 %v803, %v803
    %v820 = vpack.c.b16 %v804, %v804
    %v821 = vpack.c.b16 %v805, %v805
    %v822 = vpack.c.b16 %v806, %v806
    %v823 = vpack.c.b16 %v807, %v807
    %v824 = vpack.c.b16 %v808, %v808
    %v825 = vpack.c.b16 %v809, %v809
    %v826 = vpack.c.b16 %v810, %v810
    %v827 = vpack.c.b16 %v811, %v811
    %v828 = vpack.c.b16 %v812, %v812
    %845 = vst [vmem:[#allocation7] sm:$0xf] %v813
    %846 = vst [vmem:[#allocation7 + $0x4] sm:$0xf] %v814
    %847 = vst [vmem:[#allocation7 + $0x8] sm:$0xf] %v815
    %848 = vst [vmem:[#allocation7 + $0xc] sm:$0xf] %v816
    %849 = vst [vmem:[#allocation7 + $0x10] sm:$0xf] %v817
    %850 = vst [vmem:[#allocation7 + $0x14] sm:$0xf] %v818
    %851 = vst [vmem:[#allocation7 + $0x18] sm:$0xf] %v819
    %852 = vst [vmem:[#allocation7 + $0x1c] sm:$0xf] %v820
    %853 = vst [vmem:[#allocation7 + $0x20] sm:$0xf] %v821
    %854 = vst [vmem:[#allocation7 + $0x24] sm:$0xf] %v822
    %855 = vst [vmem:[#allocation7 + $0x28] sm:$0xf] %v823
    %856 = vst [vmem:[#allocation7 + $0x2c] sm:$0xf] %v824
    %857 = vst [vmem:[#allocation7 + $0x30] sm:$0xf] %v825
    %858 = vst [vmem:[#allocation7 + $0x34] sm:$0xf] %v826
    %859 = vst [vmem:[#allocation7 + $0x38] sm:$0xf] %v827
    %860 = vst [vmem:[#allocation7 + $0x3c] sm:$0xf] %v828
    %v861 = vlaneseq
    %v862 = vshrl.u32 %v861, 7
    %v863 = vadd.s32 %v862, 8
    %v864 = vadd.s32 %v862, 16
    %v865 = vadd.s32 %v862, 24
    %v866 = vadd.s32 %v862, 32
    %v867 = vadd.s32 %v862, 40
    %v868 = vadd.s32 %v862, 48
    %v869 = vadd.s32 %v862, 56
    %v870 = vadd.s32 %v862, 64
    %v871 = vadd.s32 %v862, 72
    %v872 = vadd.s32 %v862, 80
    %v873 = vadd.s32 %v862, 88
    %v874 = vadd.s32 %v862, 96
    %v875 = vadd.s32 %v862, 104
    %v876 = vadd.s32 %v862, 112
    %v877 = vadd.s32 %v862, 120
    %s878 = smul.u32 0, 128
    %v879 = vstv %s878
    %v880 = vadd.s32 %v862, %v879
    %v881 = vadd.s32 %v863, %v879
    %v882 = vadd.s32 %v864, %v879
    %v883 = vadd.s32 %v865, %v879
    %v884 = vadd.s32 %v866, %v879
    %v885 = vadd.s32 %v867, %v879
    %v886 = vadd.s32 %v868, %v879
    %v887 = vadd.s32 %v869, %v879
    %v888 = vadd.s32 %v870, %v879
    %v889 = vadd.s32 %v871, %v879
    %v890 = vadd.s32 %v872, %v879
    %v891 = vadd.s32 %v873, %v879
    %v892 = vadd.s32 %v874, %v879
    %v893 = vadd.s32 %v875, %v879
    %v894 = vadd.s32 %v876, %v879
    %v895 = vadd.s32 %v877, %v879
    %vm896 = vcmp.lt.s32.totalorder %v880, 16
    %vm897 = vcmp.lt.s32.totalorder %v881, 16
    %vm898 = vcmp.lt.s32.totalorder %v882, 16
    %vm899 = vcmp.lt.s32.totalorder %v883, 16
    %vm900 = vcmp.lt.s32.totalorder %v884, 16
    %vm901 = vcmp.lt.s32.totalorder %v885, 16
    %vm902 = vcmp.lt.s32.totalorder %v886, 16
    %vm903 = vcmp.lt.s32.totalorder %v887, 16
    %vm904 = vcmp.lt.s32.totalorder %v888, 16
    %vm905 = vcmp.lt.s32.totalorder %v889, 16
    %vm906 = vcmp.lt.s32.totalorder %v890, 16
    %vm907 = vcmp.lt.s32.totalorder %v891, 16
    %vm908 = vcmp.lt.s32.totalorder %v892, 16
    %vm909 = vcmp.lt.s32.totalorder %v893, 16
    %vm910 = vcmp.lt.s32.totalorder %v894, 16
    %vm911 = vcmp.lt.s32.totalorder %v895, 16
    %v912 = vsel %vm896, 1, 0
    %v913 = vsel %vm897, 1, 0
    %v914 = vsel %vm898, 1, 0
    %v915 = vsel %vm899, 1, 0
    %v916 = vsel %vm900, 1, 0
    %v917 = vsel %vm901, 1, 0
    %v918 = vsel %vm902, 1, 0
    %v919 = vsel %vm903, 1, 0
    %v920 = vsel %vm904, 1, 0
    %v921 = vsel %vm905, 1, 0
    %v922 = vsel %vm906, 1, 0
    %v923 = vsel %vm907, 1, 0
    %v924 = vsel %vm908, 1, 0
    %v925 = vsel %vm909, 1, 0
    %v926 = vsel %vm910, 1, 0
    %v927 = vsel %vm911, 1, 0
    %vm928 = vcmp.eq.s32.totalorder %v912, 1
    %vm929 = vcmp.eq.s32.totalorder %v913, 1
    %vm930 = vcmp.eq.s32.totalorder %v914, 1
    %vm931 = vcmp.eq.s32.totalorder %v915, 1
    %vm932 = vcmp.eq.s32.totalorder %v916, 1
    %vm933 = vcmp.eq.s32.totalorder %v917, 1
    %vm934 = vcmp.eq.s32.totalorder %v918, 1
    %vm935 = vcmp.eq.s32.totalorder %v919, 1
    %vm936 = vcmp.eq.s32.totalorder %v920, 1
    %vm937 = vcmp.eq.s32.totalorder %v921, 1
    %vm938 = vcmp.eq.s32.totalorder %v922, 1
    %vm939 = vcmp.eq.s32.totalorder %v923, 1
    %vm940 = vcmp.eq.s32.totalorder %v924, 1
    %vm941 = vcmp.eq.s32.totalorder %v925, 1
    %vm942 = vcmp.eq.s32.totalorder %v926, 1
    %vm943 = vcmp.eq.s32.totalorder %v927, 1
    %v944 = vsel %vm928, %v765, 0.0
    %v945 = vsel %vm929, %v766, 0.0
    %v946 = vsel %vm930, %v767, 0.0
    %v947 = vsel %vm931, %v768, 0.0
    %v948 = vsel %vm932, %v769, 0.0
    %v949 = vsel %vm933, %v770, 0.0
    %v950 = vsel %vm934, %v771, 0.0
    %v951 = vsel %vm935, %v772, 0.0
    %v952 = vsel %vm936, %v773, 0.0
    %v953 = vsel %vm937, %v774, 0.0
    %v954 = vsel %vm938, %v775, 0.0
    %v955 = vsel %vm939, %v776, 0.0
    %v956 = vsel %vm940, %v777, 0.0
    %v957 = vsel %vm941, %v778, 0.0
    %v958 = vsel %vm942, %v779, 0.0
    %v959 = vsel %vm943, %v780, 0.0
    %v960 = vadd.f32 %v944, %v945
    %v961 = vadd.f32 %v960, %v946
    %v962 = vadd.f32 %v961, %v947
    %v963 = vadd.f32 %v962, %v948
    %v964 = vadd.f32 %v963, %v949
    %v965 = vadd.f32 %v964, %v950
    %v966 = vadd.f32 %v965, %v951
    %v967 = vadd.f32 %v966, %v952
    %v968 = vadd.f32 %v967, %v953
    %v969 = vadd.f32 %v968, %v954
    %v970 = vadd.f32 %v969, %v955
    %v971 = vadd.f32 %v970, %v956
    %v972 = vadd.f32 %v971, %v957
    %v973 = vadd.f32 %v972, %v958
    %v974 = vadd.f32 %v973, %v959
    %v975 = vrot.slane %v974, 4
    %v976 = vadd.f32 %v974, %v975
    %v977 = vrot.slane %v976, 2
    %v978 = vadd.f32 %v976, %v977
    %v979 = vrot.slane %v978, 1
    %v980 = vadd.f32 %v978, %v979
    %981 = vst [vmem:[#allocation8] sm:$0x1] %v980
    %v982 = vmul.f32 %v944, %v944
    %v983 = vmul.f32 %v945, %v945
    %v984 = vmul.f32 %v946, %v946
    %v985 = vmul.f32 %v947, %v947
    %v986 = vmul.f32 %v948, %v948
    %v987 = vmul.f32 %v949, %v949
    %v988 = vmul.f32 %v950, %v950
    %v989 = vmul.f32 %v951, %v951
    %v990 = vmul.f32 %v952, %v952
    %v991 = vmul.f32 %v953, %v953
    %v992 = vmul.f32 %v954, %v954
    %v993 = vmul.f32 %v955, %v955
    %v994 = vmul.f32 %v956, %v956
    %v995 = vmul.f32 %v957, %v957
    %v996 = vmul.f32 %v958, %v958
    %v997 = vmul.f32 %v959, %v959
    %v998 = vadd.f32 %v982, %v983
    %v999 = vadd.f32 %v998, %v984
    %v1000 = vadd.f32 %v999, %v985
    %v1001 = vadd.f32 %v1000, %v986
    %v1002 = vadd.f32 %v1001, %v987
    %v1003 = vadd.f32 %v1002, %v988
    %v1004 = vadd.f32 %v1003, %v989
    %v1005 = vadd.f32 %v1004, %v990
    %v1006 = vadd.f32 %v1005, %v991
    %v1007 = vadd.f32 %v1006, %v992
    %v1008 = vadd.f32 %v1007, %v993
    %v1009 = vadd.f32 %v1008, %v994
    %v1010 = vadd.f32 %v1009, %v995
    %v1011 = vadd.f32 %v1010, %v996
    %v1012 = vadd.f32 %v1011, %v997
    %v1013 = vrot.slane %v1012, 4
    %v1014 = vadd.f32 %v1012, %v1013
    %v1015 = vrot.slane %v1014, 2
    %v1016 = vadd.f32 %v1014, %v1015
    %v1017 = vrot.slane %v1016, 1
    %v1018 = vadd.f32 %v1016, %v1017
    %1019 = vst [vmem:[#allocation10] sm:$0x1] %v1018
    // Predicated region
    $region46: #{tpu_custom_call.1} parent=1 // pred_check
      _
    $region47: #{tpu_custom_call.1} parent=1 // pred_check_branch
      %1021 = sbr.rel (0) target = $region49
    $region48: #{tpu_custom_call.1} parent=1 // pred_region
      %s1023 = ssub.s32 1024, 1024
      %1024 = vsyncadd [#allocation4], %s1023
      %s1025 = sshll.u32 [#allocation7], 4
      %s1026 = int_to_ptr.vmem [resolvable:$true] %s1025
      %1031 = dma.vmem_to_hbm [thread:$0]  %s1026, 1024, %s9, [#allocation4], 64, 64, 4
    $region49: #{tpu_custom_call.1} parent=1 // pred_fallthru
      _
    // Predicated region
    $region50: #{tpu_custom_call.1} parent=1 // pred_check
      _
    $region51: #{tpu_custom_call.1} parent=1 // pred_check_branch
      %1033 = sbr.rel (0) target = $region53
    $region52: #{tpu_custom_call.1} parent=1 // pred_region
      %s1035 = ssub.s32 16, 16
      %1036 = vsyncadd [#allocation9], %s1035
      %s1038 = sshll.u32 [#allocation8], 4
      %s1039 = int_to_ptr.vmem [resolvable:$true] %s1038
      %1041 = dma.vmem_to_hbm [thread:$0]  %s1039, 16, %s10, [#allocation9]
    $region53: #{tpu_custom_call.1} parent=1 // pred_fallthru
      _
    // Predicated region
    $region54: #{tpu_custom_call.1} parent=1 // pred_check
      _
    $region55: #{tpu_custom_call.1} parent=1 // pred_check_branch
      %1043 = sbr.rel (0) target = $region57
    $region56: #{tpu_custom_call.1} parent=1 // pred_region
      %s1045 = ssub.s32 16, 16
      %1046 = vsyncadd [#allocation9], %s1045
      %s1048 = sshll.u32 [#allocation10], 4
      %s1049 = int_to_ptr.vmem [resolvable:$true] %s1048
      %1051 = dma.vmem_to_hbm [thread:$0]  %s1049, 16, %s11, [#allocation9]
    $region57: #{tpu_custom_call.1} parent=1 // pred_fallthru
      _
    // Predicated region
    $region58: #{tpu_custom_call.1} parent=1 // pred_check
      _
    $region59: #{tpu_custom_call.1} parent=1 // pred_check_branch
      %1053 = sbr.rel (0) target = $region61
    $region60: #{tpu_custom_call.1} parent=1 // pred_region
      %1054 = dma.done [#allocation4], 1024
    $region61: #{tpu_custom_call.1} parent=1 // pred_fallthru
      _
    // Predicated region
    $region62: #{tpu_custom_call.1} parent=1 // pred_check
      _
    $region63: #{tpu_custom_call.1} parent=1 // pred_check_branch
      %1056 = sbr.rel (0) target = $region65
    $region64: #{tpu_custom_call.1} parent=1 // pred_region
      %1057 = dma.done [#allocation9], 16
    $region65: #{tpu_custom_call.1} parent=1 // pred_fallthru
      _
    // Predicated region
    $region66: #{tpu_custom_call.1} parent=1 // pred_check
      _
    $region67: #{tpu_custom_call.1} parent=1 // pred_check_branch
      %1059 = sbr.rel (0) target = $region69
    $region68: #{tpu_custom_call.1} parent=1 // pred_region
      %1060 = dma.done [#allocation9], 16
    $region69: #{tpu_custom_call.1} parent=1 // pred_fallthru
      _
    %1061 = vsyncpa [#allocation3], 1
    %1062 = vsyncpa [#allocation6], 1
    %1063 = vsyncpa [#allocation4], 1
    %1064 = vsyncpa [#allocation9], 1

</llo_original>
